<compile_context>
chip_gen: v5e
topology: v5e:2x2
jax: 0.10.0
libtpu: 0.0.40
codegen_flags: <defaults>
</compile_context>

<pallas_src>
import functools

import jax
import jax.numpy as jnp
from jax.experimental import pallas as pl
from jax.experimental.pallas import tpu as pltpu

EPS = 1e-5
LANE = 128


def _round_up(x, m):
    return (x + m - 1) // m * m


def _pad_last(x, target):
    c = x.shape[-1]
    if c == target:
        return x
    pads = [(0, 0)] * (x.ndim - 1) + [(0, target - c)]
    return jnp.pad(x, pads)


# ----------------------------------------------------------------------------
# Generation-aware VMEM budgets: v5e/v6e have 128 MiB physical VMEM, v7x 64 MiB.
# ----------------------------------------------------------------------------
def _vmem_capacity_bytes():
    try:
        info = pltpu.get_tpu_info()
        for name in ("vmem_capacity_bytes", "vmem_size_bytes", "vmem_bytes"):
            cap = getattr(info, name, None)
            if cap:
                return int(cap)
    except Exception:
        pass
    return 64 * 1024 * 1024          # conservative fallback (v7x-sized)


_VMEM_PHYS = _vmem_capacity_bytes()
if _VMEM_PHYS >= 100 * 1024 * 1024:            # v5e / v6e (128 MiB physical)
    VMEM_LIMIT_BYTES = 96 * 1024 * 1024
    TILE_BUDGET = 40 * 1024 * 1024
else:                                          # v7x (64 MiB physical) / unknown
    VMEM_LIMIT_BYTES = 48 * 1024 * 1024
    TILE_BUDGET = 18 * 1024 * 1024


def _compiler_params(n_axes):
    return pltpu.CompilerParams(
        dimension_semantics=("parallel",) * n_axes,
        vmem_limit_bytes=VMEM_LIMIT_BYTES,
    )


def _pick_rows(m, bytes_per_row, fixed_bytes, max_rows, budget=None):
    """Row tile so that 2*rows*bytes_per_row + fixed_bytes <= budget."""
    if budget is None:
        budget = TILE_BUDGET
    rows = (budget - fixed_bytes) // max(2 * bytes_per_row, 1)
    rows = max(8, min(rows, max_rows))
    rows = (rows // 8) * 8
    if rows >= m:
        return m, 1                  # single full-extent block
    return rows, pl.cdiv(m, rows)


# ----------------------------------------------------------------------------
# Pass 1a: 1x1 stride-1 conv as an M-tiled GEMM (+ optional fused input
#          affine+ReLU of the previous layer) + per-tile BN partial sums.
# ----------------------------------------------------------------------------
def _gemm_stats_kernel(*args, m_total, tm, mask_rows, fuse_in):
    if fuse_in:
        x_ref, sc_ref, sh_ref, w_ref, conv_ref, stats_ref = args
    else:
        x_ref, w_ref, conv_ref, stats_ref = args
    x = x_ref[...]
    if fuse_in:
        # Previous layer's BN+ReLU fused into the input path (VPU, hidden
        # under the MXU).
        x = jnp.maximum(x.astype(jnp.float32) * sc_ref[...] + sh_ref[...], 0.0)
        x = x.astype(jnp.bfloat16)
    acc = jnp.dot(x, w_ref[...], preferred_element_type=jnp.float32)
    conv_ref[...] = acc.astype(conv_ref.dtype)            # bf16 intermediate
    if mask_rows:                    # ragged last tile: keep stats unbiased
        rid = (jax.lax.broadcasted_iota(jnp.int32, acc.shape, 0)
               + pl.program_id(0) * tm)
        acc = jnp.where(rid < m_total, acc, 0.0)
    s1 = jnp.sum(acc, axis=0, keepdims=True)
    s2 = jnp.sum(acc * acc, axis=0, keepdims=True)
    stats_ref[...] = jnp.concatenate([s1, s2], axis=0).reshape(1, 2, -1)


def _gemm_conv(x2d, w2d, in_scale=None, in_shift=None):
    """x2d: (M, Kp) bf16, w2d: (Kp, Cp) bf16 -> (M, Cp) bf16 conv, (2, Cp) stats."""
    m, kp = x2d.shape
    cp = w2d.shape[1]
    fuse_in = in_scale is not None
    bytes_per_row = kp * 2 + cp * 2                       # bf16 in + bf16 out
    fixed = 2 * (kp * cp * 2) + 2 * (2 * cp * 4)          # weights + stats (x2 buffers)
    if fuse_in:
        fixed += 2 * (2 * kp * 4)                         # scale + shift blocks
    tm, n_tiles = _pick_rows(m, bytes_per_row, fixed, max_rows=1024)
    mask_rows = (m % tm) != 0
    kernel = functools.partial(_gemm_stats_kernel, m_total=m, tm=tm,
                               mask_rows=mask_rows, fuse_in=fuse_in)

    in_specs = [pl.BlockSpec((tm, kp), lambda i: (i, 0))]
    args = [x2d]
    if fuse_in:
        in_specs += [pl.BlockSpec((1, kp), lambda i: (0, 0)),
                     pl.BlockSpec((1, kp), lambda i: (0, 0))]
        args += [in_scale, in_shift]
    in_specs.append(pl.BlockSpec((kp, cp), lambda i: (0, 0)))
    args.append(w2d)

    conv, stats_part = pl.pallas_call(
        kernel,
        grid=(n_tiles,),
        in_specs=in_specs,
        out_specs=(
            pl.BlockSpec((tm, cp), lambda i: (i, 0)),
            pl.BlockSpec((1, 2, cp), lambda i: (i, 0, 0)),
        ),
        out_shape=(
            jax.ShapeDtypeStruct((m, cp), jnp.bfloat16),
            jax.ShapeDtypeStruct((n_tiles, 2, cp), jnp.float32),
        ),
        compiler_params=_compiler_params(1),
    )(*args)
    return conv, jnp.sum(stats_part, axis=0)


# ----------------------------------------------------------------------------
# Pass 1b: direct (3x3 dilated / strided, or strided 1x1) conv + partial sums.
# Grid = (image, Cout tile); taps reduce over ref-sliced contiguous windows.
# ----------------------------------------------------------------------------
def _direct_conv_kernel(*args, n_phases, taps, ho, wo, cinp):
    phase_refs = args[:n_phases]
    w_ref = args[n_phases]
    conv_ref = args[n_phases + 1]
    stats_ref = args[n_phases + 2]

    acc = None
    for t_idx, (p_idx, oh, ow) in enumerate(taps):
        # Slice the ref directly (no full-image value materialisation per tap).
        sl = phase_refs[p_idx][0, oh:oh + ho, ow:ow + wo, :]     # (ho, wo, Cinp)
        part = jnp.dot(sl.reshape(ho * wo, cinp), w_ref[t_idx],
                       preferred_element_type=jnp.float32)
        acc = part if acc is None else acc + part
    tn = acc.shape[-1]
    conv_ref[...] = acc.reshape(1, ho, wo, tn).astype(conv_ref.dtype)   # bf16
    s1 = jnp.sum(acc, axis=0, keepdims=True)
    s2 = jnp.sum(acc * acc, axis=0, keepdims=True)
    stats_ref[...] = jnp.concatenate([s1, s2], axis=0).reshape(1, 2, tn)


def _direct_conv(x_p, w_taps, stride, dilation, pad, ksize):
    """x_p: (N,H,W,Cinp) bf16; w_taps: (KH*KW, Cinp, Cp) bf16."""
    n, h, w_sp, cinp = x_p.shape
    kh, kw = ksize
    cp = w_taps.shape[-1]
    hp, wp = h + 2 * pad, w_sp + 2 * pad
    ho = (hp - dilation * (kh - 1) - 1) // stride + 1
    wo = (wp - dilation * (kw - 1) - 1) // stride + 1

    xp = x_p if pad == 0 else jnp.pad(x_p, ((0, 0), (pad, pad), (pad, pad), (0, 0)))

    # Phase decomposition: tap offset i*dilation lands on a fixed (row%stride,
    # col%stride) phase, so every tap is a contiguous slice of one phase image.
    phase_keys, taps = [], []
    for ih in range(kh):
        for iw in range(kw):
            key = ((ih * dilation) % stride, (iw * dilation) % stride)
            if key not in phase_keys:
                phase_keys.append(key)
            taps.append((phase_keys.index(key),
                         (ih * dilation) // stride,
                         (iw * dilation) // stride))
    if stride == 1:
        phases = [xp]                         # no extra copy
    else:
        phases = [xp[:, py::stride, px::stride, :] for (py, px) in phase_keys]
    n_phases = len(phases)

    # Cout tiling so the per-step working set fits the VMEM budget (critical
    # for 90x90x512-class maps on v7x's 64 MiB VMEM).
    in_bytes = sum(ph.shape[1] * ph.shape[2] * ph.shape[3] for ph in phases) * 2
    tn = cp

    def _ws(t):
        return (2 * in_bytes                       # phase blocks (double-buffered)
                + 2 * kh * kw * cinp * t * 2       # weight tap tile
                + 2 * ho * wo * t * 2              # bf16 conv-out tile
                + ho * wo * t * 4                  # f32 tap accumulator
                + 2 * 2 * t * 4)                   # stats tile

    while _ws(tn) > TILE_BUDGET and tn % 2 == 0 and (tn // 2) % LANE == 0:
        tn //= 2
    n_ct = cp // tn

    kernel = functools.partial(_direct_conv_kernel, n_phases=n_phases,
                               taps=tuple(taps), ho=ho, wo=wo, cinp=cinp)

    in_specs = [pl.BlockSpec((1,) + ph.shape[1:], lambda b, j: (b, 0, 0, 0))
                for ph in phases]
    in_specs.append(pl.BlockSpec((kh * kw, cinp, tn), lambda b, j: (0, 0, j)))

    conv, stats_part = pl.pallas_call(
        kernel,
        grid=(n, n_ct),          # Cout innermost: phase blocks stay resident
        in_specs=in_specs,
        out_specs=(
            pl.BlockSpec((1, ho, wo, tn), lambda b, j: (b, 0, 0, j)),
            pl.BlockSpec((1, 2, tn), lambda b, j: (b, 0, j)),
        ),
        out_shape=(
            jax.ShapeDtypeStruct((n, ho, wo, cp), jnp.bfloat16),
            jax.ShapeDtypeStruct((n, 2, cp), jnp.float32),
        ),
        compiler_params=_compiler_params(2),
    )(*phases, w_taps)
    return conv, jnp.sum(stats_part, axis=0), ho, wo


# ----------------------------------------------------------------------------
# Pass 2: per-channel affine (precomputed scale/shift), + residual, + ReLU.
# ----------------------------------------------------------------------------
def _bn_apply_kernel(sc_ref, sh_ref, conv_ref, *rest, relu, add_res):
    if add_res:
        res_ref, o_ref = rest
    else:
        (o_ref,) = rest
    y = conv_ref[...].astype(jnp.float32) * sc_ref[...] + sh_ref[...]
    if add_res:
        y = y + res_ref[...].astype(jnp.float32)
    if relu:
        y = jnp.maximum(y, 0.0)
    o_ref[...] = y.astype(o_ref.dtype)


def _bn_apply(conv2d, scale, shift, residual2d, relu):
    m, cp = conv2d.shape
    add_res = residual2d is not None
    bytes_per_row = cp * 2 + cp * 2 + (cp * 2 if add_res else 0)
    fixed = 2 * (2 * cp * 4)
    tm, n_tiles = _pick_rows(m, bytes_per_row, fixed, max_rows=2048)
    kernel = functools.partial(_bn_apply_kernel, relu=relu, add_res=add_res)
    in_specs = [pl.BlockSpec((1, cp), lambda i: (0, 0)),
                pl.BlockSpec((1, cp), lambda i: (0, 0)),
                pl.BlockSpec((tm, cp), lambda i: (i, 0))]
    args = [scale, shift, conv2d]
    if add_res:
        in_specs.append(pl.BlockSpec((tm, cp), lambda i: (i, 0)))
        args.append(residual2d)
    return pl.pallas_call(
        kernel,
        grid=(n_tiles,),
        in_specs=in_specs,
        out_specs=pl.BlockSpec((tm, cp), lambda i: (i, 0)),
        out_shape=jax.ShapeDtypeStruct((m, cp), jnp.bfloat16),
        compiler_params=_compiler_params(1),
    )(*args)


# ----------------------------------------------------------------------------
# O(C) glue: fold batch-statistics BN into per-channel (scale, shift).
# ----------------------------------------------------------------------------
def _bn_scale_shift(stats, gamma_p, beta_p, m_valid):
    inv_m = 1.0 / float(m_valid)
    mean = stats[0:1] * inv_m
    var = jnp.maximum(stats[1:2] * inv_m - mean * mean, 0.0)   # guard cancellation
    inv_std = jax.lax.rsqrt(var + EPS)
    scale = gamma_p * inv_std
    shift = beta_p - mean * scale
    return scale, shift              # each (1, Cp) f32; zero on padded channels


# ----------------------------------------------------------------------------
# One conv2DBatchNorm[Relu] layer (optionally deferring its BN into the next
# layer's conv input path).
# ----------------------------------------------------------------------------
def _conv_pass1(x_p, w_oihw, stride, dilation, in_scale, in_shift):
    n, h, w_sp, cin_p = x_p.shape
    cout, cin, kh, kw = w_oihw.shape
    cout_p = _round_up(cout, LANE)
    pad = dilation if kh > 1 else 0      # module: 3x3 pads by dilation, 1x1 by 0

    if kh == 1 and kw == 1 and stride == 1:
        w2d = w_oihw.reshape(cout, cin).T                               # (Cin, Cout)
        w2d = _pad_last(jnp.pad(w2d, ((0, cin_p - cin), (0, 0))), cout_p)
        conv2d, stats = _gemm_conv(x_p.reshape(n * h * w_sp, cin_p),
                                   w2d.astype(jnp.bfloat16), in_scale, in_shift)
        return conv2d.reshape(n, h, w_sp, cout_p), stats

    assert in_scale is None and in_shift is None
    w_t = jnp.transpose(w_oihw, (2, 3, 1, 0)).reshape(kh * kw, cin, cout)
    w_t = _pad_last(jnp.pad(w_t, ((0, 0), (0, cin_p - cin), (0, 0))), cout_p)
    conv4, stats, _, _ = _direct_conv(x_p, w_t.astype(jnp.bfloat16),
                                      stride, dilation, pad, (kh, kw))
    return conv4, stats


def _conv_bn_layer(x_p, w_oihw, gamma, beta, *, stride=1, dilation=1, relu=True,
                   residual_p=None, in_scale=None, in_shift=None, defer=False):
    n = x_p.shape[0]
    cout = w_oihw.shape[0]
    cout_p = _round_up(cout, LANE)
    conv, stats = _conv_pass1(x_p, w_oihw, stride, dilation, in_scale, in_shift)
    _, ho, wo, _ = conv.shape
    m = n * ho * wo
    gamma_p = _pad_last(gamma.reshape(1, cout), cout_p).astype(jnp.float32)
    beta_p = _pad_last(beta.reshape(1, cout), cout_p).astype(jnp.float32)
    scale, shift = _bn_scale_shift(stats, gamma_p, beta_p, m)
    if defer:
        # Pass-2 is folded into the consumer's conv prologue.
        return conv, scale, shift
    res2d = None if residual_p is None else residual_p.reshape(m, cout_p)
    y2d = _bn_apply(conv.reshape(m, cout_p), scale, shift, res2d, relu)
    return y2d.reshape(n, ho, wo, cout_p)


# ----------------------------------------------------------------------------
# Bottleneck blocks / residualBlockPSP forward (Pallas path, padded NHWC bf16)
# ----------------------------------------------------------------------------
def bottleneck_psp(x_p, p, stride, dilation):
    h1 = _conv_bn_layer(x_p, p['w1'], p['g1'], p['b1'], relu=True)
    # cbr2's BN+ReLU is deferred into cb3's GEMM input path (saves one
    # activation write+read per bottleneck).
    conv2, sc2, sh2 = _conv_bn_layer(h1, p['w2'], p['g2'], p['b2'],
                                     stride=stride, dilation=dilation, defer=True)
    in_ch, out_ch = p['w1'].shape[1], p['w3'].shape[0]
    if in_ch != out_ch:
        residual = _conv_bn_layer(x_p, p['w4'], p['g4'], p['b4'],
                                  stride=stride, relu=False)
    else:
        residual = x_p
    # relu(bn(cb3(relu(bn(conv2)))) + residual): prologue affine + epilogue fused.
    return _conv_bn_layer(conv2, p['w3'], p['g3'], p['b3'], relu=True,
                          residual_p=residual, in_scale=sc2, in_shift=sh2)


def bottleneck_identity(x_p, p, dilation):
    h1 = _conv_bn_layer(x_p, p['w1'], p['g1'], p['b1'], relu=True)
    conv2, sc2, sh2 = _conv_bn_layer(h1, p['w2'], p['g2'], p['b2'],
                                     dilation=dilation, defer=True)
    return _conv_bn_layer(conv2, p['w3'], p['g3'], p['b3'], relu=True,
                          residual_p=x_p, in_scale=sc2, in_shift=sh2)


def residual_block_psp(x_nhwc, params, stride, dilation):
    if dilation > 1:
        stride = 1
    cin_p = _round_up(x_nhwc.shape[-1], LANE)
    x_p = _pad_last(x_nhwc, cin_p).astype(jnp.bfloat16)
    y = bottleneck_psp(x_p, params[0], stride, dilation)
    for p in params[1:]:
        y = bottleneck_identity(y, p, dilation)
    out_ch = params[0]['w3'].shape[0]
    return y[..., :out_ch].astype(jnp.float32)


# ----------------------------------------------------------------------------
# Deterministic parameter initialization (shapes from the module __init__)
# ----------------------------------------------------------------------------
def init_params(key, n_blocks, in_ch, mid_ch, out_ch):
    def conv_w(k, co, ci, ks):
        return 0.1 * jax.random.normal(k, (co, ci, ks, ks), jnp.float32)

    def bn_p(k, c):
        k1, k2 = jax.random.split(k)
        g = 1.0 + 0.1 * jax.random.normal(k1, (c,), jnp.float32)
        b = 0.1 * jax.random.normal(k2, (c,), jnp.float32)
        return g, b

    keys = iter(jax.random.split(key, n_blocks * 8))
    params = []

    p = {}
    p['w1'] = conv_w(next(keys), mid_ch, in_ch, 1)
    p['g1'], p['b1'] = bn_p(next(keys), mid_ch)
    p['w2'] = conv_w(next(keys), mid_ch, mid_ch, 3)
    p['g2'], p['b2'] = bn_p(next(keys), mid_ch)
    p['w3'] = conv_w(next(keys), out_ch, mid_ch, 1)
    p['g3'], p['b3'] = bn_p(next(keys), out_ch)
    p['w4'] = conv_w(next(keys), out_ch, in_ch, 1)
    p['g4'], p['b4'] = bn_p(next(keys), out_ch)
    params.append(p)

    for _ in range(n_blocks - 1):
        p = {}
        p['w1'] = conv_w(next(keys), mid_ch, out_ch, 1)
        p['g1'], p['b1'] = bn_p(next(keys), mid_ch)
        p['w2'] = conv_w(next(keys), mid_ch, mid_ch, 3)
        p['g2'], p['b2'] = bn_p(next(keys), mid_ch)
        p['w3'] = conv_w(next(keys), out_ch, mid_ch, 1)
        p['g3'], p['b3'] = bn_p(next(keys), out_ch)
        params.append(p)
    return params


# ----------------------------------------------------------------------------
# Pure-JAX reference (NCHW, matches PyTorch training-mode forward) for checking
# ----------------------------------------------------------------------------
def _conv_ref(x, w, stride, pad, dilation):
    return jax.lax.conv_general_dilated(
        x, w, (stride, stride), ((pad, pad), (pad, pad)),
        rhs_dilation=(dilation, dilation),
        dimension_numbers=('NCHW', 'OIHW', 'NCHW'),
        precision=jax.lax.Precision.HIGHEST)


def _bn_ref(x, g, b):
    mean = jnp.mean(x, axis=(0, 2, 3), keepdims=True)
    var = jnp.var(x, axis=(0, 2, 3), keepdims=True)   # biased, like torch train BN
    return g.reshape(1, -1, 1, 1) * (x - mean) / jnp.sqrt(var + EPS) \
        + b.reshape(1, -1, 1, 1)


def _ref_bottleneck_psp(x, p, stride, dilation):
    h = jax.nn.relu(_bn_ref(_conv_ref(x, p['w1'], 1, 0, 1), p['g1'], p['b1']))
    h = jax.nn.relu(_bn_ref(_conv_ref(h, p['w2'], stride, dilation, dilation),
                            p['g2'], p['b2']))
    h = _bn_ref(_conv_ref(h, p['w3'], 1, 0, 1), p['g3'], p['b3'])
    in_ch, out_ch = p['w1'].shape[1], p['w3'].shape[0]
    if in_ch != out_ch:
        res = _bn_ref(_conv_ref(x, p['w4'], stride, 0, 1), p['g4'], p['b4'])
    else:
        res = x
    return jax.nn.relu(h + res)


def _ref_bottleneck_identity(x, p, dilation):
    h = jax.nn.relu(_bn_ref(_conv_ref(x, p['w1'], 1, 0, 1), p['g1'], p['b1']))
    h = jax.nn.relu(_bn_ref(_conv_ref(h, p['w2'], 1, dilation, dilation),
                            p['g2'], p['b2']))
    h = _bn_ref(_conv_ref(h, p['w3'], 1, 0, 1), p['g3'], p['b3'])
    return jax.nn.relu(h + x)


def _ref_residual_block_psp(x, params, stride, dilation):
    if dilation > 1:
        stride = 1
    y = _ref_bottleneck_psp(x, params[0], stride, dilation)
    for p in params[1:]:
        y = _ref_bottleneck_identity(y, p, dilation)
    return y


# ----------------------------------------------------------------------------
if __name__ == "__main__":
    key = jax.random.PRNGKey(0)
    # residualBlockPSP(n_blocks=2, in=16, mid=8, out=32, stride=2, dilation=1)
    n_blocks, in_ch, mid_ch, out_ch = 2, 16, 8, 32
    stride, dilation = 2, 1
    N, H, W = 2, 16, 16

    kx, kp = jax.random.split(key)
    x_nchw = jax.random.normal(kx, (N, in_ch, H, W), jnp.float32)
    params = init_params(kp, n_blocks, in_ch, mid_ch, out_ch)

    # Pallas path uses channel-padded NHWC bf16 internally.
    x_nhwc = jnp.transpose(x_nchw, (0, 2, 3, 1))
    y_nhwc = residual_block_psp(x_nhwc, params, stride, dilation)
    y_nhwc = jax.block_until_ready(y_nhwc)
    y_nchw = jnp.transpose(y_nhwc, (0, 3, 1, 2))

    # Reference check (tolerances account for bf16 activations, bf16 conv
    # intermediates, and bf16 weights on the MXU).
    y_ref = _ref_residual_block_psp(x_nchw, params, stride, dilation)
    err_max = float(jnp.max(jnp.abs(y_nchw - y_ref)))
    err_mean = float(jnp.mean(jnp.abs(y_nchw - y_ref)))
    assert err_max < 0.25 and err_mean < 0.05, (err_max, err_mean)

    print("KERNEL_OK")
</pallas_src>

<mosaic_0001>
module attributes {stable_mosaic.version = 11 : i64} {
  func.func @_gemm_stats_kernel(%arg0: i32, %arg1: memref<512x128xbf16, #tpu.memory_space<vmem>>, %arg2: memref<128x128xbf16, #tpu.memory_space<vmem>>, %arg3: memref<512x128xbf16, #tpu.memory_space<vmem>>, %arg4: memref<1x2x128xf32, #tpu.memory_space<vmem>>) attributes {dimension_semantics = [#tpu.dimension_semantics<parallel>], iteration_bounds = array<i64: 1>, scalar_prefetch = 0 : i64, scratch_operands = 0 : i64, tpu.core_type = #tpu.core_type<tc>, window_params = [{transform_indices = @transform_0, window_bounds = array<i64: 512, 128>}, {pipeline_mode = #tpu.pipeline_mode<synchronous>, transform_indices = @transform_1, window_bounds = array<i64: 128, 128>}, {transform_indices = @transform_2, window_bounds = array<i64: 512, 128>}, {transform_indices = @transform_3, window_bounds = array<i64: 1, 2, 128>}]} {
    %c0 = arith.constant 0 : index
    %c0_0 = arith.constant 0 : index
    %0 = vector.load %arg1[%c0, %c0_0] : memref<512x128xbf16, #tpu.memory_space<vmem>>, vector<512x128xbf16>
    %c0_1 = arith.constant 0 : index
    %c0_2 = arith.constant 0 : index
    %1 = vector.load %arg2[%c0_1, %c0_2] : memref<128x128xbf16, #tpu.memory_space<vmem>>, vector<128x128xbf16>
    %cst = arith.constant dense<0.000000e+00> : vector<512x128xf32>
    %2 = tpu.matmul %0, %1, %cst {dimension_numbers = #tpu.dot_dimension_numbers<[1], [0], [0], [1], [0, 0, 1, 1], [], []>} : vector<512x128xbf16>, vector<128x128xbf16>, vector<512x128xf32> -> vector<512x128xf32>
    %3 = arith.truncf %2 : vector<512x128xf32> to vector<512x128xbf16>
    %c0_3 = arith.constant 0 : index
    %c0_4 = arith.constant 0 : index
    %4 = vector.load %arg3[%c0_3, %c0_4] : memref<512x128xbf16, #tpu.memory_space<vmem>>, vector<512x128xbf16>
    tpu.vector_store %arg3[%c0_3, %c0_4], %3 {strides = array<i32>} : memref<512x128xbf16, #tpu.memory_space<vmem>>, vector<512x128xbf16>,
    %cst_5 = arith.constant dense<0.000000e+00> : vector<128xf32>
    %5 = vector.multi_reduction <add>, %2, %cst_5 [0] : vector<512x128xf32> to vector<128xf32>
    %6 = vector.shape_cast %5 : vector<128xf32> to vector<1x128xf32>
    %7 = arith.mulf %2, %2 : vector<512x128xf32>
    %cst_6 = arith.constant dense<0.000000e+00> : vector<128xf32>
    %8 = vector.multi_reduction <add>, %7, %cst_6 [0] : vector<512x128xf32> to vector<128xf32>
    %9 = vector.shape_cast %8 : vector<128xf32> to vector<1x128xf32>
    %10 = tpu.concatenate %6, %9 in 0 : vector<1x128xf32>, vector<1x128xf32> -> vector<2x128xf32>
    %11 = vector.shape_cast %10 : vector<2x128xf32> to vector<1x2x128xf32>
    %c0_7 = arith.constant 0 : index
    %c0_8 = arith.constant 0 : index
    %c0_9 = arith.constant 0 : index
    %12 = vector.load %arg4[%c0_7, %c0_8, %c0_9] : memref<1x2x128xf32, #tpu.memory_space<vmem>>, vector<1x2x128xf32>
    tpu.vector_store %arg4[%c0_7, %c0_8, %c0_9], %11 {strides = array<i32>} : memref<1x2x128xf32, #tpu.memory_space<vmem>>, vector<1x2x128xf32>,
    return
  }
  func.func @transform_0(%arg0: i32) -> (i32, i32) {
    %c0_i32 = arith.constant 0 : i32
    %c0_i32_0 = arith.constant 0 : i32
    return %arg0, %c0_i32 : i32, i32
  }
  func.func @transform_1(%arg0: i32) -> (i32, i32) {
    %c0_i32 = arith.constant 0 : i32
    %c0_i32_0 = arith.constant 0 : i32
    %c0_i32_1 = arith.constant 0 : i32
    return %c0_i32, %c0_i32_0 : i32, i32
  }
  func.func @transform_2(%arg0: i32) -> (i32, i32) {
    %c0_i32 = arith.constant 0 : i32
    %c0_i32_0 = arith.constant 0 : i32
    return %arg0, %c0_i32 : i32, i32
  }
  func.func @transform_3(%arg0: i32) -> (i32, i32, i32) {
    %c0_i32 = arith.constant 0 : i32
    %c0_i32_0 = arith.constant 0 : i32
    %c0_i32_1 = arith.constant 0 : i32
    return %arg0, %c0_i32, %c0_i32_0 : i32, i32, i32
  }
}

</mosaic_0001>

<llo_original>
// kernel: tpu_custom_call.1
$region0: #{tpu_custom_call.1}
  #allocation0 [shape = 'u32[]', space=smem, size = 0x4, offset = 0x4, fixed_abs, tag = 'smem constant byte address 0x4 - core index']
  #allocation1 [shape = 'u32[72,128]{1,0:T(1,128)}', space=vmem, size = 0x9000, scoped, tag = 'internal scratch']
  %s0 = inlined_call_operand.hbm [shape: bf16[512,128], index: 0, kind: input, shape index: {}]
  %s1 = inlined_call_operand.hbm [shape: bf16[128,128], index: 1, kind: input, shape index: {}]
  %s2 = inlined_call_operand.hbm [shape: bf16[512,128], index: 2, kind: output, shape index: {0}]
  %s3 = inlined_call_operand.hbm [shape: f32[1,2,128], index: 3, kind: output, shape index: {1}]
  %4 = xla_tuple %s2, %s3
  %s5 = sld [smem:[#allocation0]]
  $region34: #{tpu_custom_call.1} parent=0
    _
  %s7 = ssub.s32 1, %s5
  %s8 = scalar_select 0, %s7, %s5
  $region1: #{tpu_custom_call.1} parent=0
    #allocation2 [shape = 'u8[131072]{0}', space=vmem, size = 0x20000, scoped, tag = 'input window, operand 0, single buffered']
    #allocation3 [shape = 's32[1]{0}', space=sflag, size = 0x4, scoped, tag = 'scoped memory for tpu_custom_call.1']
    #allocation4 [shape = 's32[1]{0}', space=sflag, size = 0x4, scoped, tag = 'scoped memory for tpu_custom_call.1']
    #allocation5 [shape = 'u8[32768]{0}', space=vmem, size = 0x8000, scoped, tag = 'input window, operand 1, single buffered']
    #allocation6 [shape = 's32[1]{0}', space=sflag, size = 0x4, scoped, tag = 'scoped memory for tpu_custom_call.1']
    #allocation7 [shape = 'u8[131072]{0}', space=vmem, size = 0x20000, scoped, tag = 'output window, operand 0, single buffered']
    #allocation8 [shape = 'u8[1024]{0}', space=vmem, size = 0x400, scoped, tag = 'output window, operand 1, single buffered']
    #allocation9 [shape = 's32[1]{0}', space=sflag, size = 0x4, scoped, tag = 'scoped memory for tpu_custom_call.1']
    %9 = vsyncpa [#allocation3], 0
    %10 = vsyncpa [#allocation6], 0
    %11 = vsyncpa [#allocation4], 0
    %12 = vsyncpa [#allocation9], 0
    // Predicated region
    $region2: #{tpu_custom_call.1} parent=1 // pred_check
      _
    $region3: #{tpu_custom_call.1} parent=1 // pred_check_branch
      %14 = sbr.rel (0) target = $region5
    $region4: #{tpu_custom_call.1} parent=1 // pred_region
      %16 = vsyncadd [#allocation3], 0
      %s17 = sshll.u32 %s0, 4
      %s18 = int_to_ptr.hbm [resolvable:$true] %s17
      %s19 = sshll.u32 [#allocation2], 4
      %s20 = int_to_ptr.vmem [resolvable:$true] %s19
      %25 = dma.hbm_to_vmem [thread:$0]  %s18, 4096, %s20, [#allocation3], 64, 64, 4
    $region5: #{tpu_custom_call.1} parent=1 // pred_fallthru
      _
    // Predicated region
    $region6: #{tpu_custom_call.1} parent=1 // pred_check
      _
    $region7: #{tpu_custom_call.1} parent=1 // pred_check_branch
      %27 = sbr.rel (0) target = $region9
    $region8: #{tpu_custom_call.1} parent=1 // pred_region
      %29 = vsyncadd [#allocation6], 0
      %s30 = sshll.u32 %s1, 4
      %s31 = int_to_ptr.hbm [resolvable:$true] %s30
      %s32 = sshll.u32 [#allocation5], 4
      %s33 = int_to_ptr.vmem [resolvable:$true] %s32
      %38 = dma.hbm_to_vmem [thread:$0]  %s31, 1024, %s33, [#allocation6], 64, 64, 4
    $region9: #{tpu_custom_call.1} parent=1 // pred_fallthru
      _
    // Predicated region
    $region10: #{tpu_custom_call.1} parent=1 // pred_check
      _
    $region11: #{tpu_custom_call.1} parent=1 // pred_check_branch
      %40 = sbr.rel (0) target = $region13
    $region12: #{tpu_custom_call.1} parent=1 // pred_region
      %42 = dma.done [#allocation3], 4096
    $region13: #{tpu_custom_call.1} parent=1 // pred_fallthru
      _
    // Predicated region
    $region14: #{tpu_custom_call.1} parent=1 // pred_check
      _
    $region15: #{tpu_custom_call.1} parent=1 // pred_check_branch
      %44 = sbr.rel (0) target = $region17
    $region16: #{tpu_custom_call.1} parent=1 // pred_region
      %46 = dma.done [#allocation6], 1024
    $region17: #{tpu_custom_call.1} parent=1 // pred_fallthru
      _
    %v47 = vld [vmem:[#allocation2] sm:$0xf]
    %v48 = vld [vmem:[#allocation2 + $0x4] sm:$0xf]
    %v49 = vld [vmem:[#allocation2 + $0x8] sm:$0xf]
    %v50 = vld [vmem:[#allocation2 + $0xc] sm:$0xf]
    %v51 = vld [vmem:[#allocation2 + $0x10] sm:$0xf]
    %v52 = vld [vmem:[#allocation2 + $0x14] sm:$0xf]
    %v53 = vld [vmem:[#allocation2 + $0x18] sm:$0xf]
    %v54 = vld [vmem:[#allocation2 + $0x1c] sm:$0xf]
    %v55 = vld [vmem:[#allocation2 + $0x20] sm:$0xf]
    %v56 = vld [vmem:[#allocation2 + $0x24] sm:$0xf]
    %v57 = vld [vmem:[#allocation2 + $0x28] sm:$0xf]
    %v58 = vld [vmem:[#allocation2 + $0x2c] sm:$0xf]
    %v59 = vld [vmem:[#allocation2 + $0x30] sm:$0xf]
    %v60 = vld [vmem:[#allocation2 + $0x34] sm:$0xf]
    %v61 = vld [vmem:[#allocation2 + $0x38] sm:$0xf]
    %v62 = vld [vmem:[#allocation2 + $0x3c] sm:$0xf]
    %v63 = vld [vmem:[#allocation2 + $0x40] sm:$0xf]
    %v64 = vld [vmem:[#allocation2 + $0x44] sm:$0xf]
    %v65 = vld [vmem:[#allocation2 + $0x48] sm:$0xf]
    %v66 = vld [vmem:[#allocation2 + $0x4c] sm:$0xf]
    %v67 = vld [vmem:[#allocation2 + $0x50] sm:$0xf]
    %v68 = vld [vmem:[#allocation2 + $0x54] sm:$0xf]
    %v69 = vld [vmem:[#allocation2 + $0x58] sm:$0xf]
    %v70 = vld [vmem:[#allocation2 + $0x5c] sm:$0xf]
    %v71 = vld [vmem:[#allocation2 + $0x60] sm:$0xf]
    %v72 = vld [vmem:[#allocation2 + $0x64] sm:$0xf]
    %v73 = vld [vmem:[#allocation2 + $0x68] sm:$0xf]
    %v74 = vld [vmem:[#allocation2 + $0x6c] sm:$0xf]
    %v75 = vld [vmem:[#allocation2 + $0x70] sm:$0xf]
    %v76 = vld [vmem:[#allocation2 + $0x74] sm:$0xf]
    %v77 = vld [vmem:[#allocation2 + $0x78] sm:$0xf]
    %v78 = vld [vmem:[#allocation2 + $0x7c] sm:$0xf]
    %v79 = vld [vmem:[#allocation2 + $0x80] sm:$0xf]
    %v80 = vld [vmem:[#allocation2 + $0x84] sm:$0xf]
    %v81 = vld [vmem:[#allocation2 + $0x88] sm:$0xf]
    %v82 = vld [vmem:[#allocation2 + $0x8c] sm:$0xf]
    %v83 = vld [vmem:[#allocation2 + $0x90] sm:$0xf]
    %v84 = vld [vmem:[#allocation2 + $0x94] sm:$0xf]
    %v85 = vld [vmem:[#allocation2 + $0x98] sm:$0xf]
    %v86 = vld [vmem:[#allocation2 + $0x9c] sm:$0xf]
    %v87 = vld [vmem:[#allocation2 + $0xa0] sm:$0xf]
    %v88 = vld [vmem:[#allocation2 + $0xa4] sm:$0xf]
    %v89 = vld [vmem:[#allocation2 + $0xa8] sm:$0xf]
    %v90 = vld [vmem:[#allocation2 + $0xac] sm:$0xf]
    %v91 = vld [vmem:[#allocation2 + $0xb0] sm:$0xf]
    %v92 = vld [vmem:[#allocation2 + $0xb4] sm:$0xf]
    %v93 = vld [vmem:[#allocation2 + $0xb8] sm:$0xf]
    %v94 = vld [vmem:[#allocation2 + $0xbc] sm:$0xf]
    %v95 = vld [vmem:[#allocation2 + $0xc0] sm:$0xf]
    %v96 = vld [vmem:[#allocation2 + $0xc4] sm:$0xf]
    %v97 = vld [vmem:[#allocation2 + $0xc8] sm:$0xf]
    %v98 = vld [vmem:[#allocation2 + $0xcc] sm:$0xf]
    %v99 = vld [vmem:[#allocation2 + $0xd0] sm:$0xf]
    %v100 = vld [vmem:[#allocation2 + $0xd4] sm:$0xf]
    %v101 = vld [vmem:[#allocation2 + $0xd8] sm:$0xf]
    %v102 = vld [vmem:[#allocation2 + $0xdc] sm:$0xf]
    %v103 = vld [vmem:[#allocation2 + $0xe0] sm:$0xf]
    %v104 = vld [vmem:[#allocation2 + $0xe4] sm:$0xf]
    %v105 = vld [vmem:[#allocation2 + $0xe8] sm:$0xf]
    %v106 = vld [vmem:[#allocation2 + $0xec] sm:$0xf]
    %v107 = vld [vmem:[#allocation2 + $0xf0] sm:$0xf]
    %v108 = vld [vmem:[#allocation2 + $0xf4] sm:$0xf]
    %v109 = vld [vmem:[#allocation2 + $0xf8] sm:$0xf]
    %v110 = vld [vmem:[#allocation2 + $0xfc] sm:$0xf]
    %v111 = vld [vmem:[#allocation5] sm:$0xf]
    %v112 = vld [vmem:[#allocation5 + $0x4] sm:$0xf]
    %v113 = vld [vmem:[#allocation5 + $0x8] sm:$0xf]
    %v114 = vld [vmem:[#allocation5 + $0xc] sm:$0xf]
    %v115 = vld [vmem:[#allocation5 + $0x10] sm:$0xf]
    %v116 = vld [vmem:[#allocation5 + $0x14] sm:$0xf]
    %v117 = vld [vmem:[#allocation5 + $0x18] sm:$0xf]
    %v118 = vld [vmem:[#allocation5 + $0x1c] sm:$0xf]
    %v119 = vld [vmem:[#allocation5 + $0x20] sm:$0xf]
    %v120 = vld [vmem:[#allocation5 + $0x24] sm:$0xf]
    %v121 = vld [vmem:[#allocation5 + $0x28] sm:$0xf]
    %v122 = vld [vmem:[#allocation5 + $0x2c] sm:$0xf]
    %v123 = vld [vmem:[#allocation5 + $0x30] sm:$0xf]
    %v124 = vld [vmem:[#allocation5 + $0x34] sm:$0xf]
    %v125 = vld [vmem:[#allocation5 + $0x38] sm:$0xf]
    %v126 = vld [vmem:[#allocation5 + $0x3c] sm:$0xf]
    %v191 = vunpack.c.l.b16 %v47
    %v192 = vunpack.c.l.b16 %v48
    %v193 = vunpack.c.l.b16 %v49
    %v194 = vunpack.c.l.b16 %v50
    %v195 = vunpack.c.l.b16 %v51
    %v196 = vunpack.c.l.b16 %v52
    %v197 = vunpack.c.l.b16 %v53
    %v198 = vunpack.c.l.b16 %v54
    %v199 = vunpack.c.l.b16 %v55
    %v200 = vunpack.c.l.b16 %v56
    %v201 = vunpack.c.l.b16 %v57
    %v202 = vunpack.c.l.b16 %v58
    %v203 = vunpack.c.l.b16 %v59
    %v204 = vunpack.c.l.b16 %v60
    %v205 = vunpack.c.l.b16 %v61
    %v206 = vunpack.c.l.b16 %v62
    %v207 = vunpack.c.l.b16 %v63
    %v208 = vunpack.c.l.b16 %v64
    %v209 = vunpack.c.l.b16 %v65
    %v210 = vunpack.c.l.b16 %v66
    %v211 = vunpack.c.l.b16 %v67
    %v212 = vunpack.c.l.b16 %v68
    %v213 = vunpack.c.l.b16 %v69
    %v214 = vunpack.c.l.b16 %v70
    %v215 = vunpack.c.l.b16 %v71
    %v216 = vunpack.c.l.b16 %v72
    %v217 = vunpack.c.l.b16 %v73
    %v218 = vunpack.c.l.b16 %v74
    %v219 = vunpack.c.l.b16 %v75
    %v220 = vunpack.c.l.b16 %v76
    %v221 = vunpack.c.l.b16 %v77
    %v222 = vunpack.c.l.b16 %v78
    %v223 = vunpack.c.l.b16 %v79
    %v224 = vunpack.c.l.b16 %v80
    %v225 = vunpack.c.l.b16 %v81
    %v226 = vunpack.c.l.b16 %v82
    %v227 = vunpack.c.l.b16 %v83
    %v228 = vunpack.c.l.b16 %v84
    %v229 = vunpack.c.l.b16 %v85
    %v230 = vunpack.c.l.b16 %v86
    %v231 = vunpack.c.l.b16 %v87
    %v232 = vunpack.c.l.b16 %v88
    %v233 = vunpack.c.l.b16 %v89
    %v234 = vunpack.c.l.b16 %v90
    %v235 = vunpack.c.l.b16 %v91
    %v236 = vunpack.c.l.b16 %v92
    %v237 = vunpack.c.l.b16 %v93
    %v238 = vunpack.c.l.b16 %v94
    %v239 = vunpack.c.l.b16 %v95
    %v240 = vunpack.c.l.b16 %v96
    %v241 = vunpack.c.l.b16 %v97
    %v242 = vunpack.c.l.b16 %v98
    %v243 = vunpack.c.l.b16 %v99
    %v244 = vunpack.c.l.b16 %v100
    %v245 = vunpack.c.l.b16 %v101
    %v246 = vunpack.c.l.b16 %v102
    %v247 = vunpack.c.l.b16 %v103
    %v248 = vunpack.c.l.b16 %v104
    %v249 = vunpack.c.l.b16 %v105
    %v250 = vunpack.c.l.b16 %v106
    %v251 = vunpack.c.l.b16 %v107
    %v252 = vunpack.c.l.b16 %v108
    %v253 = vunpack.c.l.b16 %v109
    %v254 = vunpack.c.l.b16 %v110
    %v255 = vpack.c.b16 %v192, %v191
    %v256 = vpack.c.b16 %v194, %v193
    %v257 = vpack.c.b16 %v196, %v195
    %v258 = vpack.c.b16 %v198, %v197
    %v259 = vpack.c.b16 %v200, %v199
    %v260 = vpack.c.b16 %v202, %v201
    %v261 = vpack.c.b16 %v204, %v203
    %v262 = vpack.c.b16 %v206, %v205
    %v263 = vpack.c.b16 %v208, %v207
    %v264 = vpack.c.b16 %v210, %v209
    %v265 = vpack.c.b16 %v212, %v211
    %v266 = vpack.c.b16 %v214, %v213
    %v267 = vpack.c.b16 %v216, %v215
    %v268 = vpack.c.b16 %v218, %v217
    %v269 = vpack.c.b16 %v220, %v219
    %v270 = vpack.c.b16 %v222, %v221
    %v271 = vpack.c.b16 %v224, %v223
    %v272 = vpack.c.b16 %v226, %v225
    %v273 = vpack.c.b16 %v228, %v227
    %v274 = vpack.c.b16 %v230, %v229
    %v275 = vpack.c.b16 %v232, %v231
    %v276 = vpack.c.b16 %v234, %v233
    %v277 = vpack.c.b16 %v236, %v235
    %v278 = vpack.c.b16 %v238, %v237
    %v279 = vpack.c.b16 %v240, %v239
    %v280 = vpack.c.b16 %v242, %v241
    %v281 = vpack.c.b16 %v244, %v243
    %v282 = vpack.c.b16 %v246, %v245
    %v283 = vpack.c.b16 %v248, %v247
    %v284 = vpack.c.b16 %v250, %v249
    %v285 = vpack.c.b16 %v252, %v251
    %v286 = vpack.c.b16 %v254, %v253
    %v335 = vunpack.c.l.b16 %v111
    %v336 = vunpack.c.l.b16 %v112
    %v337 = vunpack.c.l.b16 %v113
    %v338 = vunpack.c.l.b16 %v114
    %v339 = vunpack.c.l.b16 %v115
    %v340 = vunpack.c.l.b16 %v116
    %v341 = vunpack.c.l.b16 %v117
    %v342 = vunpack.c.l.b16 %v118
    %v343 = vunpack.c.l.b16 %v119
    %v344 = vunpack.c.l.b16 %v120
    %v345 = vunpack.c.l.b16 %v121
    %v346 = vunpack.c.l.b16 %v122
    %v347 = vunpack.c.l.b16 %v123
    %v348 = vunpack.c.l.b16 %v124
    %v349 = vunpack.c.l.b16 %v125
    %v350 = vunpack.c.l.b16 %v126
    %v351 = vpack.c.b16 %v336, %v335
    %v352 = vpack.c.b16 %v338, %v337
    %v353 = vpack.c.b16 %v340, %v339
    %v354 = vpack.c.b16 %v342, %v341
    %v355 = vpack.c.b16 %v344, %v343
    %v356 = vpack.c.b16 %v346, %v345
    %v357 = vpack.c.b16 %v348, %v347
    %v358 = vpack.c.b16 %v350, %v349
    %367 = vmatpush.bf16.msra.mxu0 %v358
    %368 = vmatpush.bf16.msra.mxu0 %v357
    %369 = vmatpush.bf16.msra.mxu0 %v356
    %370 = vmatpush.bf16.msra.mxu0 %v355
    %371 = vmatpush.bf16.msra.mxu0 %v354
    %372 = vmatpush.bf16.msra.mxu0 %v353
    %373 = vmatpush.bf16.msra.mxu0 %v352
    %374 = vmatpush.bf16.msra.mxu0 %v351
    %375 = vmatmul.bf16.gmra.mxu0 %v255
    %v376 = vpop.f32.mrf.mxu0
    %v377 = vadd.f32 0.0, %v376
    %v378 = vpop.f32.mrf.mxu0
    %v379 = vadd.f32 0.0, %v378
    %380 = vmatmul.bf16.gmra.mxu0 %v256
    %v381 = vpop.f32.mrf.mxu0
    %v382 = vadd.f32 0.0, %v381
    %v383 = vpop.f32.mrf.mxu0
    %v384 = vadd.f32 0.0, %v383
    %385 = vmatmul.bf16.gmra.mxu0 %v257
    %v386 = vpop.f32.mrf.mxu0
    %v387 = vadd.f32 0.0, %v386
    %v388 = vpop.f32.mrf.mxu0
    %v389 = vadd.f32 0.0, %v388
    %390 = vmatmul.bf16.gmra.mxu0 %v258
    %v391 = vpop.f32.mrf.mxu0
    %v392 = vadd.f32 0.0, %v391
    %v393 = vpop.f32.mrf.mxu0
    %v394 = vadd.f32 0.0, %v393
    %395 = vmatmul.bf16.gmra.mxu0 %v259
    %v396 = vpop.f32.mrf.mxu0
    %v397 = vadd.f32 0.0, %v396
    %v398 = vpop.f32.mrf.mxu0
    %v399 = vadd.f32 0.0, %v398
    %400 = vmatmul.bf16.gmra.mxu0 %v260
    %v401 = vpop.f32.mrf.mxu0
    %v402 = vadd.f32 0.0, %v401
    %v403 = vpop.f32.mrf.mxu0
    %v404 = vadd.f32 0.0, %v403
    %405 = vmatmul.bf16.gmra.mxu0 %v261
    %v406 = vpop.f32.mrf.mxu0
    %v407 = vadd.f32 0.0, %v406
    %v408 = vpop.f32.mrf.mxu0
    %v409 = vadd.f32 0.0, %v408
    %410 = vmatmul.bf16.gmra.mxu0 %v262
    %v411 = vpop.f32.mrf.mxu0
    %v412 = vadd.f32 0.0, %v411
    %v413 = vpop.f32.mrf.mxu0
    %v414 = vadd.f32 0.0, %v413
    %415 = vmatmul.bf16.gmra.mxu0 %v263
    %v416 = vpop.f32.mrf.mxu0
    %v417 = vadd.f32 0.0, %v416
    %v418 = vpop.f32.mrf.mxu0
    %v419 = vadd.f32 0.0, %v418
    %420 = vmatmul.bf16.gmra.mxu0 %v264
    %v421 = vpop.f32.mrf.mxu0
    %v422 = vadd.f32 0.0, %v421
    %v423 = vpop.f32.mrf.mxu0
    %v424 = vadd.f32 0.0, %v423
    %425 = vmatmul.bf16.gmra.mxu0 %v265
    %v426 = vpop.f32.mrf.mxu0
    %v427 = vadd.f32 0.0, %v426
    %v428 = vpop.f32.mrf.mxu0
    %v429 = vadd.f32 0.0, %v428
    %430 = vmatmul.bf16.gmra.mxu0 %v266
    %v431 = vpop.f32.mrf.mxu0
    %v432 = vadd.f32 0.0, %v431
    %v433 = vpop.f32.mrf.mxu0
    %v434 = vadd.f32 0.0, %v433
    %435 = vmatmul.bf16.gmra.mxu0 %v267
    %v436 = vpop.f32.mrf.mxu0
    %v437 = vadd.f32 0.0, %v436
    %v438 = vpop.f32.mrf.mxu0
    %v439 = vadd.f32 0.0, %v438
    %440 = vmatmul.bf16.gmra.mxu0 %v268
    %v441 = vpop.f32.mrf.mxu0
    %v442 = vadd.f32 0.0, %v441
    %v443 = vpop.f32.mrf.mxu0
    %v444 = vadd.f32 0.0, %v443
    %445 = vmatmul.bf16.gmra.mxu0 %v269
    %v446 = vpop.f32.mrf.mxu0
    %v447 = vadd.f32 0.0, %v446
    %v448 = vpop.f32.mrf.mxu0
    %v449 = vadd.f32 0.0, %v448
    %450 = vmatmul.bf16.gmra.mxu0 %v270
    %v451 = vpop.f32.mrf.mxu0
    %v452 = vadd.f32 0.0, %v451
    %v453 = vpop.f32.mrf.mxu0
    %v454 = vadd.f32 0.0, %v453
    %455 = vmatmul.bf16.gmra.mxu0 %v271
    %v456 = vpop.f32.mrf.mxu0
    %v457 = vadd.f32 0.0, %v456
    %v458 = vpop.f32.mrf.mxu0
    %v459 = vadd.f32 0.0, %v458
    %460 = vmatmul.bf16.gmra.mxu0 %v272
    %v461 = vpop.f32.mrf.mxu0
    %v462 = vadd.f32 0.0, %v461
    %v463 = vpop.f32.mrf.mxu0
    %v464 = vadd.f32 0.0, %v463
    %465 = vmatmul.bf16.gmra.mxu0 %v273
    %v466 = vpop.f32.mrf.mxu0
    %v467 = vadd.f32 0.0, %v466
    %v468 = vpop.f32.mrf.mxu0
    %v469 = vadd.f32 0.0, %v468
    %470 = vmatmul.bf16.gmra.mxu0 %v274
    %v471 = vpop.f32.mrf.mxu0
    %v472 = vadd.f32 0.0, %v471
    %v473 = vpop.f32.mrf.mxu0
    %v474 = vadd.f32 0.0, %v473
    %475 = vmatmul.bf16.gmra.mxu0 %v275
    %v476 = vpop.f32.mrf.mxu0
    %v477 = vadd.f32 0.0, %v476
    %v478 = vpop.f32.mrf.mxu0
    %v479 = vadd.f32 0.0, %v478
    %480 = vmatmul.bf16.gmra.mxu0 %v276
    %v481 = vpop.f32.mrf.mxu0
    %v482 = vadd.f32 0.0, %v481
    %v483 = vpop.f32.mrf.mxu0
    %v484 = vadd.f32 0.0, %v483
    %485 = vmatmul.bf16.gmra.mxu0 %v277
    %v486 = vpop.f32.mrf.mxu0
    %v487 = vadd.f32 0.0, %v486
    %v488 = vpop.f32.mrf.mxu0
    %v489 = vadd.f32 0.0, %v488
    %490 = vmatmul.bf16.gmra.mxu0 %v278
    %v491 = vpop.f32.mrf.mxu0
    %v492 = vadd.f32 0.0, %v491
    %v493 = vpop.f32.mrf.mxu0
    %v494 = vadd.f32 0.0, %v493
    %495 = vmatmul.bf16.gmra.mxu0 %v279
    %v496 = vpop.f32.mrf.mxu0
    %v497 = vadd.f32 0.0, %v496
    %v498 = vpop.f32.mrf.mxu0
    %v499 = vadd.f32 0.0, %v498
    %500 = vmatmul.bf16.gmra.mxu0 %v280
    %v501 = vpop.f32.mrf.mxu0
    %v502 = vadd.f32 0.0, %v501
    %v503 = vpop.f32.mrf.mxu0
    %v504 = vadd.f32 0.0, %v503
    %505 = vmatmul.bf16.gmra.mxu0 %v281
    %v506 = vpop.f32.mrf.mxu0
    %v507 = vadd.f32 0.0, %v506
    %v508 = vpop.f32.mrf.mxu0
    %v509 = vadd.f32 0.0, %v508
    %510 = vmatmul.bf16.gmra.mxu0 %v282
    %v511 = vpop.f32.mrf.mxu0
    %v512 = vadd.f32 0.0, %v511
    %v513 = vpop.f32.mrf.mxu0
    %v514 = vadd.f32 0.0, %v513
    %515 = vmatmul.bf16.gmra.mxu0 %v283
    %v516 = vpop.f32.mrf.mxu0
    %v517 = vadd.f32 0.0, %v516
    %v518 = vpop.f32.mrf.mxu0
    %v519 = vadd.f32 0.0, %v518
    %520 = vmatmul.bf16.gmra.mxu0 %v284
    %v521 = vpop.f32.mrf.mxu0
    %v522 = vadd.f32 0.0, %v521
    %v523 = vpop.f32.mrf.mxu0
    %v524 = vadd.f32 0.0, %v523
    %525 = vmatmul.bf16.gmra.mxu0 %v285
    %v526 = vpop.f32.mrf.mxu0
    %v527 = vadd.f32 0.0, %v526
    %v528 = vpop.f32.mrf.mxu0
    %v529 = vadd.f32 0.0, %v528
    %530 = vmatmul.bf16.gmra.mxu0 %v286
    %v531 = vpop.f32.mrf.mxu0
    %v532 = vadd.f32 0.0, %v531
    %v533 = vpop.f32.mrf.mxu0
    %v534 = vadd.f32 0.0, %v533
    %535 = vdwg.mxu0
    %v536 = vpack.c.bf16 %v377, %v377
    %v537 = vpack.c.bf16 %v379, %v379
    %v538 = vpack.c.bf16 %v382, %v382
    %v539 = vpack.c.bf16 %v384, %v384
    %v540 = vpack.c.bf16 %v387, %v387
    %v541 = vpack.c.bf16 %v389, %v389
    %v542 = vpack.c.bf16 %v392, %v392
    %v543 = vpack.c.bf16 %v394, %v394
    %v544 = vpack.c.bf16 %v397, %v397
    %v545 = vpack.c.bf16 %v399, %v399
    %v546 = vpack.c.bf16 %v402, %v402
    %v547 = vpack.c.bf16 %v404, %v404
    %v548 = vpack.c.bf16 %v407, %v407
    %v549 = vpack.c.bf16 %v409, %v409
    %v550 = vpack.c.bf16 %v412, %v412
    %v551 = vpack.c.bf16 %v414, %v414
    %v552 = vpack.c.bf16 %v417, %v417
    %v553 = vpack.c.bf16 %v419, %v419
    %v554 = vpack.c.bf16 %v422, %v422
    %v555 = vpack.c.bf16 %v424, %v424
    %v556 = vpack.c.bf16 %v427, %v427
    %v557 = vpack.c.bf16 %v429, %v429
    %v558 = vpack.c.bf16 %v432, %v432
    %v559 = vpack.c.bf16 %v434, %v434
    %v560 = vpack.c.bf16 %v437, %v437
    %v561 = vpack.c.bf16 %v439, %v439
    %v562 = vpack.c.bf16 %v442, %v442
    %v563 = vpack.c.bf16 %v444, %v444
    %v564 = vpack.c.bf16 %v447, %v447
    %v565 = vpack.c.bf16 %v449, %v449
    %v566 = vpack.c.bf16 %v452, %v452
    %v567 = vpack.c.bf16 %v454, %v454
    %v568 = vpack.c.bf16 %v457, %v457
    %v569 = vpack.c.bf16 %v459, %v459
    %v570 = vpack.c.bf16 %v462, %v462
    %v571 = vpack.c.bf16 %v464, %v464
    %v572 = vpack.c.bf16 %v467, %v467
    %v573 = vpack.c.bf16 %v469, %v469
    %v574 = vpack.c.bf16 %v472, %v472
    %v575 = vpack.c.bf16 %v474, %v474
    %v576 = vpack.c.bf16 %v477, %v477
    %v577 = vpack.c.bf16 %v479, %v479
    %v578 = vpack.c.bf16 %v482, %v482
    %v579 = vpack.c.bf16 %v484, %v484
    %v580 = vpack.c.bf16 %v487, %v487
    %v581 = vpack.c.bf16 %v489, %v489
    %v582 = vpack.c.bf16 %v492, %v492
    %v583 = vpack.c.bf16 %v494, %v494
    %v584 = vpack.c.bf16 %v497, %v497
    %v585 = vpack.c.bf16 %v499, %v499
    %v586 = vpack.c.bf16 %v502, %v502
    %v587 = vpack.c.bf16 %v504, %v504
    %v588 = vpack.c.bf16 %v507, %v507
    %v589 = vpack.c.bf16 %v509, %v509
    %v590 = vpack.c.bf16 %v512, %v512
    %v591 = vpack.c.bf16 %v514, %v514
    %v592 = vpack.c.bf16 %v517, %v517
    %v593 = vpack.c.bf16 %v519, %v519
    %v594 = vpack.c.bf16 %v522, %v522
    %v595 = vpack.c.bf16 %v524, %v524
    %v596 = vpack.c.bf16 %v527, %v527
    %v597 = vpack.c.bf16 %v529, %v529
    %v598 = vpack.c.bf16 %v532, %v532
    %v599 = vpack.c.bf16 %v534, %v534
    %600 = vst [vmem:[#allocation7] sm:$0xf] %v536
    %601 = vst [vmem:[#allocation7 + $0x4] sm:$0xf] %v537
    %602 = vst [vmem:[#allocation7 + $0x8] sm:$0xf] %v538
    %603 = vst [vmem:[#allocation7 + $0xc] sm:$0xf] %v539
    %604 = vst [vmem:[#allocation7 + $0x10] sm:$0xf] %v540
    %605 = vst [vmem:[#allocation7 + $0x14] sm:$0xf] %v541
    %606 = vst [vmem:[#allocation7 + $0x18] sm:$0xf] %v542
    %607 = vst [vmem:[#allocation7 + $0x1c] sm:$0xf] %v543
    %608 = vst [vmem:[#allocation7 + $0x20] sm:$0xf] %v544
    %609 = vst [vmem:[#allocation7 + $0x24] sm:$0xf] %v545
    %610 = vst [vmem:[#allocation7 + $0x28] sm:$0xf] %v546
    %611 = vst [vmem:[#allocation7 + $0x2c] sm:$0xf] %v547
    %612 = vst [vmem:[#allocation7 + $0x30] sm:$0xf] %v548
    %613 = vst [vmem:[#allocation7 + $0x34] sm:$0xf] %v549
    %614 = vst [vmem:[#allocation7 + $0x38] sm:$0xf] %v550
    %615 = vst [vmem:[#allocation7 + $0x3c] sm:$0xf] %v551
    %616 = vst [vmem:[#allocation7 + $0x40] sm:$0xf] %v552
    %617 = vst [vmem:[#allocation7 + $0x44] sm:$0xf] %v553
    %618 = vst [vmem:[#allocation7 + $0x48] sm:$0xf] %v554
    %619 = vst [vmem:[#allocation7 + $0x4c] sm:$0xf] %v555
    %620 = vst [vmem:[#allocation7 + $0x50] sm:$0xf] %v556
    %621 = vst [vmem:[#allocation7 + $0x54] sm:$0xf] %v557
    %622 = vst [vmem:[#allocation7 + $0x58] sm:$0xf] %v558
    %623 = vst [vmem:[#allocation7 + $0x5c] sm:$0xf] %v559
    %624 = vst [vmem:[#allocation7 + $0x60] sm:$0xf] %v560
    %625 = vst [vmem:[#allocation7 + $0x64] sm:$0xf] %v561
    %626 = vst [vmem:[#allocation7 + $0x68] sm:$0xf] %v562
    %627 = vst [vmem:[#allocation7 + $0x6c] sm:$0xf] %v563
    %628 = vst [vmem:[#allocation7 + $0x70] sm:$0xf] %v564
    %629 = vst [vmem:[#allocation7 + $0x74] sm:$0xf] %v565
    %630 = vst [vmem:[#allocation7 + $0x78] sm:$0xf] %v566
    %631 = vst [vmem:[#allocation7 + $0x7c] sm:$0xf] %v567
    %632 = vst [vmem:[#allocation7 + $0x80] sm:$0xf] %v568
    %633 = vst [vmem:[#allocation7 + $0x84] sm:$0xf] %v569
    %634 = vst [vmem:[#allocation7 + $0x88] sm:$0xf] %v570
    %635 = vst [vmem:[#allocation7 + $0x8c] sm:$0xf] %v571
    %636 = vst [vmem:[#allocation7 + $0x90] sm:$0xf] %v572
    %637 = vst [vmem:[#allocation7 + $0x94] sm:$0xf] %v573
    %638 = vst [vmem:[#allocation7 + $0x98] sm:$0xf] %v574
    %639 = vst [vmem:[#allocation7 + $0x9c] sm:$0xf] %v575
    %640 = vst [vmem:[#allocation7 + $0xa0] sm:$0xf] %v576
    %641 = vst [vmem:[#allocation7 + $0xa4] sm:$0xf] %v577
    %642 = vst [vmem:[#allocation7 + $0xa8] sm:$0xf] %v578
    %643 = vst [vmem:[#allocation7 + $0xac] sm:$0xf] %v579
    %644 = vst [vmem:[#allocation7 + $0xb0] sm:$0xf] %v580
    %645 = vst [vmem:[#allocation7 + $0xb4] sm:$0xf] %v581
    %646 = vst [vmem:[#allocation7 + $0xb8] sm:$0xf] %v582
    %647 = vst [vmem:[#allocation7 + $0xbc] sm:$0xf] %v583
    %648 = vst [vmem:[#allocation7 + $0xc0] sm:$0xf] %v584
    %649 = vst [vmem:[#allocation7 + $0xc4] sm:$0xf] %v585
    %650 = vst [vmem:[#allocation7 + $0xc8] sm:$0xf] %v586
    %651 = vst [vmem:[#allocation7 + $0xcc] sm:$0xf] %v587
    %652 = vst [vmem:[#allocation7 + $0xd0] sm:$0xf] %v588
    %653 = vst [vmem:[#allocation7 + $0xd4] sm:$0xf] %v589
    %654 = vst [vmem:[#allocation7 + $0xd8] sm:$0xf] %v590
    %655 = vst [vmem:[#allocation7 + $0xdc] sm:$0xf] %v591
    %656 = vst [vmem:[#allocation7 + $0xe0] sm:$0xf] %v592
    %657 = vst [vmem:[#allocation7 + $0xe4] sm:$0xf] %v593
    %658 = vst [vmem:[#allocation7 + $0xe8] sm:$0xf] %v594
    %659 = vst [vmem:[#allocation7 + $0xec] sm:$0xf] %v595
    %660 = vst [vmem:[#allocation7 + $0xf0] sm:$0xf] %v596
    %661 = vst [vmem:[#allocation7 + $0xf4] sm:$0xf] %v597
    %662 = vst [vmem:[#allocation7 + $0xf8] sm:$0xf] %v598
    %663 = vst [vmem:[#allocation7 + $0xfc] sm:$0xf] %v599
    %v664 = vadd.f32 %v377, %v379
    %v665 = vadd.f32 %v664, %v382
    %v666 = vadd.f32 %v665, %v384
    %v667 = vadd.f32 %v666, %v387
    %v668 = vadd.f32 %v667, %v389
    %v669 = vadd.f32 %v668, %v392
    %v670 = vadd.f32 %v669, %v394
    %v671 = vadd.f32 %v670, %v397
    %v672 = vadd.f32 %v671, %v399
    %v673 = vadd.f32 %v672, %v402
    %v674 = vadd.f32 %v673, %v404
    %v675 = vadd.f32 %v674, %v407
    %v676 = vadd.f32 %v675, %v409
    %v677 = vadd.f32 %v676, %v412
    %v678 = vadd.f32 %v677, %v414
    %v679 = vadd.f32 %v678, %v417
    %v680 = vadd.f32 %v679, %v419
    %v681 = vadd.f32 %v680, %v422
    %v682 = vadd.f32 %v681, %v424
    %v683 = vadd.f32 %v682, %v427
    %v684 = vadd.f32 %v683, %v429
    %v685 = vadd.f32 %v684, %v432
    %v686 = vadd.f32 %v685, %v434
    %v687 = vadd.f32 %v686, %v437
    %v688 = vadd.f32 %v687, %v439
    %v689 = vadd.f32 %v688, %v442
    %v690 = vadd.f32 %v689, %v444
    %v691 = vadd.f32 %v690, %v447
    %v692 = vadd.f32 %v691, %v449
    %v693 = vadd.f32 %v692, %v452
    %v694 = vadd.f32 %v693, %v454
    %v695 = vadd.f32 %v694, %v457
    %v696 = vadd.f32 %v695, %v459
    %v697 = vadd.f32 %v696, %v462
    %v698 = vadd.f32 %v697, %v464
    %v699 = vadd.f32 %v698, %v467
    %v700 = vadd.f32 %v699, %v469
    %v701 = vadd.f32 %v700, %v472
    %v702 = vadd.f32 %v701, %v474
    %v703 = vadd.f32 %v702, %v477
    %v704 = vadd.f32 %v703, %v479
    %v705 = vadd.f32 %v704, %v482
    %v706 = vadd.f32 %v705, %v484
    %v707 = vadd.f32 %v706, %v487
    %v708 = vadd.f32 %v707, %v489
    %v709 = vadd.f32 %v708, %v492
    %v710 = vadd.f32 %v709, %v494
    %v711 = vadd.f32 %v710, %v497
    %v712 = vadd.f32 %v711, %v499
    %v713 = vadd.f32 %v712, %v502
    %v714 = vadd.f32 %v713, %v504
    %v715 = vadd.f32 %v714, %v507
    %v716 = vadd.f32 %v715, %v509
    %v717 = vadd.f32 %v716, %v512
    %v718 = vadd.f32 %v717, %v514
    %v719 = vadd.f32 %v718, %v517
    %v720 = vadd.f32 %v719, %v519
    %v721 = vadd.f32 %v720, %v522
    %v722 = vadd.f32 %v721, %v524
    %v723 = vadd.f32 %v722, %v527
    %v724 = vadd.f32 %v723, %v529
    %v725 = vadd.f32 %v724, %v532
    %v726 = vadd.f32 %v725, %v534
    %v727 = vrot.slane %v726, 4
    %v728 = vadd.f32 %v726, %v727
    %v729 = vrot.slane %v728, 2
    %v730 = vadd.f32 %v728, %v729
    %v731 = vrot.slane %v730, 1
    %v732 = vadd.f32 %v730, %v731
    %v733 = vmul.f32 %v377, %v377
    %v734 = vmul.f32 %v379, %v379
    %v735 = vmul.f32 %v382, %v382
    %v736 = vmul.f32 %v384, %v384
    %v737 = vmul.f32 %v387, %v387
    %v738 = vmul.f32 %v389, %v389
    %v739 = vmul.f32 %v392, %v392
    %v740 = vmul.f32 %v394, %v394
    %v741 = vmul.f32 %v397, %v397
    %v742 = vmul.f32 %v399, %v399
    %v743 = vmul.f32 %v402, %v402
    %v744 = vmul.f32 %v404, %v404
    %v745 = vmul.f32 %v407, %v407
    %v746 = vmul.f32 %v409, %v409
    %v747 = vmul.f32 %v412, %v412
    %v748 = vmul.f32 %v414, %v414
    %v749 = vmul.f32 %v417, %v417
    %v750 = vmul.f32 %v419, %v419
    %v751 = vmul.f32 %v422, %v422
    %v752 = vmul.f32 %v424, %v424
    %v753 = vmul.f32 %v427, %v427
    %v754 = vmul.f32 %v429, %v429
    %v755 = vmul.f32 %v432, %v432
    %v756 = vmul.f32 %v434, %v434
    %v757 = vmul.f32 %v437, %v437
    %v758 = vmul.f32 %v439, %v439
    %v759 = vmul.f32 %v442, %v442
    %v760 = vmul.f32 %v444, %v444
    %v761 = vmul.f32 %v447, %v447
    %v762 = vmul.f32 %v449, %v449
    %v763 = vmul.f32 %v452, %v452
    %v764 = vmul.f32 %v454, %v454
    %v765 = vmul.f32 %v457, %v457
    %v766 = vmul.f32 %v459, %v459
    %v767 = vmul.f32 %v462, %v462
    %v768 = vmul.f32 %v464, %v464
    %v769 = vmul.f32 %v467, %v467
    %v770 = vmul.f32 %v469, %v469
    %v771 = vmul.f32 %v472, %v472
    %v772 = vmul.f32 %v474, %v474
    %v773 = vmul.f32 %v477, %v477
    %v774 = vmul.f32 %v479, %v479
    %v775 = vmul.f32 %v482, %v482
    %v776 = vmul.f32 %v484, %v484
    %v777 = vmul.f32 %v487, %v487
    %v778 = vmul.f32 %v489, %v489
    %v779 = vmul.f32 %v492, %v492
    %v780 = vmul.f32 %v494, %v494
    %v781 = vmul.f32 %v497, %v497
    %v782 = vmul.f32 %v499, %v499
    %v783 = vmul.f32 %v502, %v502
    %v784 = vmul.f32 %v504, %v504
    %v785 = vmul.f32 %v507, %v507
    %v786 = vmul.f32 %v509, %v509
    %v787 = vmul.f32 %v512, %v512
    %v788 = vmul.f32 %v514, %v514
    %v789 = vmul.f32 %v517, %v517
    %v790 = vmul.f32 %v519, %v519
    %v791 = vmul.f32 %v522, %v522
    %v792 = vmul.f32 %v524, %v524
    %v793 = vmul.f32 %v527, %v527
    %v794 = vmul.f32 %v529, %v529
    %v795 = vmul.f32 %v532, %v532
    %v796 = vmul.f32 %v534, %v534
    %v797 = vadd.f32 %v733, %v734
    %v798 = vadd.f32 %v797, %v735
    %v799 = vadd.f32 %v798, %v736
    %v800 = vadd.f32 %v799, %v737
    %v801 = vadd.f32 %v800, %v738
    %v802 = vadd.f32 %v801, %v739
    %v803 = vadd.f32 %v802, %v740
    %v804 = vadd.f32 %v803, %v741
    %v805 = vadd.f32 %v804, %v742
    %v806 = vadd.f32 %v805, %v743
    %v807 = vadd.f32 %v806, %v744
    %v808 = vadd.f32 %v807, %v745
    %v809 = vadd.f32 %v808, %v746
    %v810 = vadd.f32 %v809, %v747
    %v811 = vadd.f32 %v810, %v748
    %v812 = vadd.f32 %v811, %v749
    %v813 = vadd.f32 %v812, %v750
    %v814 = vadd.f32 %v813, %v751
    %v815 = vadd.f32 %v814, %v752
    %v816 = vadd.f32 %v815, %v753
    %v817 = vadd.f32 %v816, %v754
    %v818 = vadd.f32 %v817, %v755
    %v819 = vadd.f32 %v818, %v756
    %v820 = vadd.f32 %v819, %v757
    %v821 = vadd.f32 %v820, %v758
    %v822 = vadd.f32 %v821, %v759
    %v823 = vadd.f32 %v822, %v760
    %v824 = vadd.f32 %v823, %v761
    %v825 = vadd.f32 %v824, %v762
    %v826 = vadd.f32 %v825, %v763
    %v827 = vadd.f32 %v826, %v764
    %v828 = vadd.f32 %v827, %v765
    %v829 = vadd.f32 %v828, %v766
    %v830 = vadd.f32 %v829, %v767
    %v831 = vadd.f32 %v830, %v768
    %v832 = vadd.f32 %v831, %v769
    %v833 = vadd.f32 %v832, %v770
    %v834 = vadd.f32 %v833, %v771
    %v835 = vadd.f32 %v834, %v772
    %v836 = vadd.f32 %v835, %v773
    %v837 = vadd.f32 %v836, %v774
    %v838 = vadd.f32 %v837, %v775
    %v839 = vadd.f32 %v838, %v776
    %v840 = vadd.f32 %v839, %v777
    %v841 = vadd.f32 %v840, %v778
    %v842 = vadd.f32 %v841, %v779
    %v843 = vadd.f32 %v842, %v780
    %v844 = vadd.f32 %v843, %v781
    %v845 = vadd.f32 %v844, %v782
    %v846 = vadd.f32 %v845, %v783
    %v847 = vadd.f32 %v846, %v784
    %v848 = vadd.f32 %v847, %v785
    %v849 = vadd.f32 %v848, %v786
    %v850 = vadd.f32 %v849, %v787
    %v851 = vadd.f32 %v850, %v788
    %v852 = vadd.f32 %v851, %v789
    %v853 = vadd.f32 %v852, %v790
    %v854 = vadd.f32 %v853, %v791
    %v855 = vadd.f32 %v854, %v792
    %v856 = vadd.f32 %v855, %v793
    %v857 = vadd.f32 %v856, %v794
    %v858 = vadd.f32 %v857, %v795
    %v859 = vadd.f32 %v858, %v796
    %v860 = vrot.slane %v859, 4
    %v861 = vadd.f32 %v859, %v860
    %v862 = vrot.slane %v861, 2
    %v863 = vadd.f32 %v861, %v862
    %v864 = vrot.slane %v863, 1
    %v865 = vadd.f32 %v863, %v864
    %vm866 = vcmask 1040384
    %v867 = vsel %vm866, %v732, %v865
    %868 = vst [vmem:[#allocation8] sm:$0x3] %v867
    // Predicated region
    $region18: #{tpu_custom_call.1} parent=1 // pred_check
      _
    $region19: #{tpu_custom_call.1} parent=1 // pred_check_branch
      %870 = sbr.rel (0) target = $region21
    $region20: #{tpu_custom_call.1} parent=1 // pred_region
      %872 = vsyncadd [#allocation4], 0
      %s873 = sshll.u32 [#allocation7], 4
      %s874 = int_to_ptr.vmem [resolvable:$true] %s873
      %s875 = sshll.u32 %s2, 4
      %s876 = int_to_ptr.hbm [resolvable:$true] %s875
      %881 = dma.vmem_to_hbm [thread:$0]  %s874, 4096, %s876, [#allocation4], 64, 64, 4
    $region21: #{tpu_custom_call.1} parent=1 // pred_fallthru
      _
    // Predicated region
    $region22: #{tpu_custom_call.1} parent=1 // pred_check
      _
    $region23: #{tpu_custom_call.1} parent=1 // pred_check_branch
      %883 = sbr.rel (0) target = $region25
    $region24: #{tpu_custom_call.1} parent=1 // pred_region
      %885 = vsyncadd [#allocation9], 0
      %s887 = sshll.u32 [#allocation8], 4
      %s888 = int_to_ptr.vmem [resolvable:$true] %s887
      %s889 = sshll.u32 %s3, 4
      %s890 = int_to_ptr.hbm [resolvable:$true] %s889
      %892 = dma.vmem_to_hbm [thread:$0]  %s888, 32, %s890, [#allocation9]
    $region25: #{tpu_custom_call.1} parent=1 // pred_fallthru
      _
    // Predicated region
    $region26: #{tpu_custom_call.1} parent=1 // pred_check
      _
    $region27: #{tpu_custom_call.1} parent=1 // pred_check_branch
      %894 = sbr.rel (0) target = $region29
    $region28: #{tpu_custom_call.1} parent=1 // pred_region
      %896 = dma.done [#allocation4], 4096
    $region29: #{tpu_custom_call.1} parent=1 // pred_fallthru
      _
    // Predicated region
    $region30: #{tpu_custom_call.1} parent=1 // pred_check
      _
    $region31: #{tpu_custom_call.1} parent=1 // pred_check_branch
      %898 = sbr.rel (0) target = $region33
    $region32: #{tpu_custom_call.1} parent=1 // pred_region
      %900 = dma.done [#allocation9], 32
    $region33: #{tpu_custom_call.1} parent=1 // pred_fallthru
      _
    %901 = vsyncpa [#allocation3], 1
    %902 = vsyncpa [#allocation6], 1
    %903 = vsyncpa [#allocation4], 1
    %904 = vsyncpa [#allocation9], 1

</llo_original>
